<compile_context>
chip_gen: v7x
topology: tpu7x:2x2x1
jax: 0.10.0
libtpu: 0.0.40
codegen_flags: <defaults>
</compile_context>

<pallas_src>
import jax
import jax.numpy as jnp
from jax.experimental import pallas as pl
from jax.experimental.pallas import tpu as pltpu


# ------------------------------ fused G+D kernel ------------------------------
def gd_kernel(zg_ref, wg_ref, bg_ref, x_ref, w1_ref, b1_ref, ed_ref, bout_ref,
              out_ref, img_ref):
    nb = x_ref.shape[0]  # B (static)

    # ---- Generator: G_z = tanh([z, e_g] @ [W_gz; W_ge] + b_g) ---------------
    # bf16 MXU operands, f32 accumulate; tanh in f32 (no bf16 EUP on v5e).
    pre = jnp.dot(zg_ref[...], wg_ref[...],
                  preferred_element_type=jnp.float32) + bg_ref[...]
    img_ref[0:nb, :] = jnp.tanh(pre).astype(img_ref.dtype)   # fake half
    img_ref[nb:2 * nb, :] = x_ref[...]                        # real half

    # ---- Discriminator on both halves with ONE batched matmul ---------------
    h = jnp.dot(img_ref[...], w1_ref[...],
                preferred_element_type=jnp.float32) + b1_ref[...]
    h = jnp.maximum(h, 0.0)

    # h @ W_out + sum(h * W_emb[cls]) folded: ed_ref already = W_emb[cls]+W_out.T
    res = jnp.sum(h * ed_ref[...], axis=-1) + bout_ref[0]     # (2B,)
    out_ref[...] = res[None, :]                                # lane-dense row


# --------------------------------- wrapper ------------------------------------
def g_d_forward(z, gy, x, dy, g_params, d_params):
    """Mirrors G_D.forward with split_D=False, x is not None, dy is not None."""
    B, zdim = z.shape
    C, H, W = x.shape[1], x.shape[2], x.shape[3]
    CHW = C * H * W
    edim = g_params["w_shared"].shape[1]
    hdim = d_params["w1"].shape[1]
    bf = jnp.bfloat16

    # Embedding gathers (replace K=n_classes one-hot matmuls; done once here).
    e_g = jnp.take(g_params["w_shared"], gy, axis=0)                    # (B, E)

    # [z, e_g] / [W_gz; W_ge] concatenated -> single generator matmul (bf16 MXU).
    zg = jnp.concatenate([z, e_g], axis=1).astype(bf)                   # (B, Z+E)
    wg = jnp.concatenate([g_params["w_gz"], g_params["w_ge"]],
                         axis=0).astype(bf)                             # (Z+E, CHW)

    # W_out folded into the per-sample class embedding (exact, f32).
    cls = jnp.concatenate([gy, dy], axis=0)                             # (2B,)
    e_d = (jnp.take(d_params["w_emb"], cls, axis=0)
           + d_params["w_out"].reshape(1, hdim))                        # (2B, hdim)

    x_flat = x.reshape(B, CHW).astype(bf)            # NCHW flatten (matches torch)
    w1 = d_params["w1"].astype(bf)
    b_out = d_params["b_out"].reshape(1)             # scalar -> SMEM

    out = pl.pallas_call(
        gd_kernel,
        out_shape=jax.ShapeDtypeStruct((1, 2 * B), jnp.float32),
        grid_spec=pltpu.PrefetchScalarGridSpec(
            num_scalar_prefetch=0,
            grid=(1,),                                # single fused step
            in_specs=[
                pl.BlockSpec((B, zdim + edim), lambda i: (0, 0)),     # [z, e_g]
                pl.BlockSpec((zdim + edim, CHW), lambda i: (0, 0)),   # [W_gz; W_ge]
                pl.BlockSpec((1, CHW), lambda i: (0, 0)),             # b_g
                pl.BlockSpec((B, CHW), lambda i: (0, 0)),             # x (flat)
                pl.BlockSpec((CHW, hdim), lambda i: (0, 0)),          # W1
                pl.BlockSpec((1, hdim), lambda i: (0, 0)),            # b1
                pl.BlockSpec((2 * B, hdim), lambda i: (0, 0)),        # W_emb[cls]+W_out.T
                pl.BlockSpec(memory_space=pltpu.MemorySpace.SMEM),    # b_out scalar
            ],
            out_specs=pl.BlockSpec((1, 2 * B), lambda i: (0, 0)),
            scratch_shapes=[pltpu.VMEM((2 * B, CHW), bf)],  # resident D input
        ),
        compiler_params=pltpu.CompilerParams(
            dimension_semantics=("arbitrary",)),      # keep single-core (v7x too)
    )(zg, wg, g_params["b_g"], x_flat, w1, d_params["b1"], e_d, b_out)

    # torch.split(D_out, [G_z.shape[0], x.shape[0]])
    D_fake = out[0, :B].reshape(B, 1)
    D_real = out[0, B:].reshape(B, 1)
    return D_fake, D_real
    # TODO(synk): split_D=True / return_G_z=True branches and the fp16<->fp32
    # crossing (G.fp16 != D.fp16) are control-flow glue and are not exercised.


# ----------------------------------- main -----------------------------------
if __name__ == "__main__":
    B = 2            # batch
    C, H, W = 4, 16, 16
    Z_DIM = 32
    N_CLASSES = 4
    E_DIM = 16       # shared embedding dim
    H_DIM = 64       # D hidden dim
    CHW = C * H * W

    key = jax.random.PRNGKey(0)
    ks = jax.random.split(key, 10)

    # Deterministic synthetic parameters (shapes implied by the forward pass).
    g_params = {
        "w_shared": 0.02 * jax.random.normal(ks[0], (N_CLASSES, E_DIM), jnp.float32),
        "w_gz":     0.02 * jax.random.normal(ks[1], (Z_DIM, CHW), jnp.float32),
        "w_ge":     0.02 * jax.random.normal(ks[2], (E_DIM, CHW), jnp.float32),
        "b_g":      jnp.zeros((1, CHW), jnp.float32),
    }
    d_params = {
        "w1":    0.02 * jax.random.normal(ks[3], (CHW, H_DIM), jnp.float32),
        "b1":    jnp.zeros((1, H_DIM), jnp.float32),
        "w_emb": 0.02 * jax.random.normal(ks[4], (N_CLASSES, H_DIM), jnp.float32),
        "w_out": 0.02 * jax.random.normal(ks[5], (H_DIM, 1), jnp.float32),
        "b_out": jnp.zeros((1, 1), jnp.float32),
    }

    z  = jax.random.normal(ks[6], (B, Z_DIM), jnp.float32)
    gy = jax.random.randint(ks[7], (B,), 0, N_CLASSES)
    x  = jax.random.normal(ks[8], (B, C, H, W), jnp.float32)   # real images, NCHW
    dy = jax.random.randint(ks[9], (B,), 0, N_CLASSES)

    fwd = jax.jit(lambda z, gy, x, dy: g_d_forward(z, gy, x, dy, g_params, d_params))
    D_fake, D_real = fwd(z, gy, x, dy)
    jax.block_until_ready((D_fake, D_real))

    # Pure-JAX f32 reference (same math as the torch module) — loose tolerance
    # because the kernel streams MXU operands as bf16.
    def ref_forward_f32(z, gy, x, dy):
        e_g = g_params["w_shared"][gy]
        G_z = jnp.tanh(z @ g_params["w_gz"] + e_g @ g_params["w_ge"] + g_params["b_g"])
        d_in = jnp.concatenate([G_z, x.reshape(B, -1)], axis=0)
        cls = jnp.concatenate([gy, dy], axis=0)
        h = jax.nn.relu(d_in @ d_params["w1"] + d_params["b1"])
        out = (h @ d_params["w_out"] + d_params["b_out"]
               + jnp.sum(h * d_params["w_emb"][cls], axis=-1, keepdims=True))
        return out[:B], out[B:]

    # bf16-matched reference (same rounding of MXU operands, f32 accumulation)
    # — validates the gather / concat / W_out-fold rewrites at tight tolerance.
    def ref_forward_bf16(z, gy, x, dy):
        bf = jnp.bfloat16
        e_g = g_params["w_shared"][gy]
        zg = jnp.concatenate([z, e_g], axis=1).astype(bf)
        wg = jnp.concatenate([g_params["w_gz"], g_params["w_ge"]], axis=0).astype(bf)
        G_z = jnp.tanh(jnp.dot(zg, wg, preferred_element_type=jnp.float32)
                       + g_params["b_g"])
        d_in = jnp.concatenate([G_z.astype(bf), x.reshape(B, -1).astype(bf)], axis=0)
        cls = jnp.concatenate([gy, dy], axis=0)
        h = jax.nn.relu(jnp.dot(d_in, d_params["w1"].astype(bf),
                                preferred_element_type=jnp.float32) + d_params["b1"])
        w_comb = d_params["w_emb"][cls] + d_params["w_out"].reshape(1, -1)
        out = jnp.sum(h * w_comb, axis=-1, keepdims=True) + d_params["b_out"]
        return out[:B], out[B:]

    rf32, rr32 = ref_forward_f32(z, gy, x, dy)
    rfb, rrb = ref_forward_bf16(z, gy, x, dy)

    assert D_fake.shape == (B, 1) and D_real.shape == (B, 1)
    assert jnp.all(jnp.isfinite(D_fake)) and jnp.all(jnp.isfinite(D_real))
    # tight check against numerics-matched reference
    assert jnp.allclose(D_fake, rfb, atol=1e-3, rtol=1e-3)
    assert jnp.allclose(D_real, rrb, atol=1e-3, rtol=1e-3)
    # semantics check against the full-f32 PyTorch-equivalent reference
    assert jnp.allclose(D_fake, rf32, atol=3e-2, rtol=3e-2)
    assert jnp.allclose(D_real, rr32, atol=3e-2, rtol=3e-2)
    print("KERNEL_OK")
</pallas_src>

<mosaic_0001>
module attributes {stable_mosaic.version = 11 : i64} {
  func.func @gd_kernel(%arg0: i32, %arg1: memref<2x48xbf16, #tpu.memory_space<vmem>>, %arg2: memref<48x1024xbf16, #tpu.memory_space<vmem>>, %arg3: memref<1x1024xf32, #tpu.memory_space<vmem>>, %arg4: memref<2x1024xbf16, #tpu.memory_space<vmem>>, %arg5: memref<1024x64xbf16, #tpu.memory_space<vmem>>, %arg6: memref<1x64xf32, #tpu.memory_space<vmem>>, %arg7: memref<4x64xf32, #tpu.memory_space<vmem>>, %arg8: memref<1xf32, #tpu.memory_space<smem>>, %arg9: memref<1x4xf32, #tpu.memory_space<vmem>>, %arg10: memref<4x1024xbf16, #tpu.memory_space<vmem>>) attributes {dimension_semantics = [#tpu.dimension_semantics<arbitrary>], iteration_bounds = array<i64: 1>, scalar_prefetch = 0 : i64, scratch_operands = 1 : i64, tpu.core_type = #tpu.core_type<tc>, window_params = [{pipeline_mode = #tpu.pipeline_mode<synchronous>, transform_indices = @transform_0, window_bounds = array<i64: 2, 48>}, {pipeline_mode = #tpu.pipeline_mode<synchronous>, transform_indices = @transform_1, window_bounds = array<i64: 48, 1024>}, {pipeline_mode = #tpu.pipeline_mode<synchronous>, transform_indices = @transform_2, window_bounds = array<i64: 1, 1024>}, {pipeline_mode = #tpu.pipeline_mode<synchronous>, transform_indices = @transform_3, window_bounds = array<i64: 2, 1024>}, {pipeline_mode = #tpu.pipeline_mode<synchronous>, transform_indices = @transform_4, window_bounds = array<i64: 1024, 64>}, {pipeline_mode = #tpu.pipeline_mode<synchronous>, transform_indices = @transform_5, window_bounds = array<i64: 1, 64>}, {pipeline_mode = #tpu.pipeline_mode<synchronous>, transform_indices = @transform_6, window_bounds = array<i64: 4, 64>}, {transform_indices = @transform_7, window_bounds = array<i64: 1>}, {pipeline_mode = #tpu.pipeline_mode<synchronous>, transform_indices = @transform_8, window_bounds = array<i64: 1, 4>}]} {
    %c0 = arith.constant 0 : index
    %c0_0 = arith.constant 0 : index
    %0 = vector.load %arg1[%c0, %c0_0] : memref<2x48xbf16, #tpu.memory_space<vmem>>, vector<2x48xbf16>
    %c0_1 = arith.constant 0 : index
    %c0_2 = arith.constant 0 : index
    %1 = vector.load %arg2[%c0_1, %c0_2] : memref<48x1024xbf16, #tpu.memory_space<vmem>>, vector<48x1024xbf16>
    %cst = arith.constant dense<0.000000e+00> : vector<2x1024xf32>
    %2 = tpu.matmul %0, %1, %cst {dimension_numbers = #tpu.dot_dimension_numbers<[1], [0], [0], [1], [0, 0, 1, 1], [], []>} : vector<2x48xbf16>, vector<48x1024xbf16>, vector<2x1024xf32> -> vector<2x1024xf32>
    %c0_3 = arith.constant 0 : index
    %c0_4 = arith.constant 0 : index
    %3 = vector.load %arg3[%c0_3, %c0_4] : memref<1x1024xf32, #tpu.memory_space<vmem>>, vector<1x1024xf32>
    %4 = vector.broadcast %3 : vector<1x1024xf32> to vector<2x1024xf32>
    %5 = arith.addf %2, %4 : vector<2x1024xf32>
    %6 = math.tanh %5 : vector<2x1024xf32>
    %7 = arith.truncf %6 : vector<2x1024xf32> to vector<2x1024xbf16>
    %c0_5 = arith.constant 0 : index
    %c0_6 = arith.constant 0 : index
    %8 = vector.load %arg10[%c0_5, %c0_6] : memref<4x1024xbf16, #tpu.memory_space<vmem>>, vector<2x1024xbf16>
    tpu.vector_store %arg10[%c0_5, %c0_6], %7 {strides = array<i32>} : memref<4x1024xbf16, #tpu.memory_space<vmem>>, vector<2x1024xbf16>,
    %c0_7 = arith.constant 0 : index
    %c0_8 = arith.constant 0 : index
    %9 = vector.load %arg4[%c0_7, %c0_8] : memref<2x1024xbf16, #tpu.memory_space<vmem>>, vector<2x1024xbf16>
    %c2 = arith.constant 2 : index
    %c0_9 = arith.constant 0 : index
    %10 = vector.load %arg10[%c2, %c0_9] : memref<4x1024xbf16, #tpu.memory_space<vmem>>, vector<2x1024xbf16>
    tpu.vector_store %arg10[%c2, %c0_9], %9 {strides = array<i32>} : memref<4x1024xbf16, #tpu.memory_space<vmem>>, vector<2x1024xbf16>,
    %c0_10 = arith.constant 0 : index
    %c0_11 = arith.constant 0 : index
    %11 = vector.load %arg10[%c0_10, %c0_11] : memref<4x1024xbf16, #tpu.memory_space<vmem>>, vector<4x1024xbf16>
    %c0_12 = arith.constant 0 : index
    %c0_13 = arith.constant 0 : index
    %12 = vector.load %arg5[%c0_12, %c0_13] : memref<1024x64xbf16, #tpu.memory_space<vmem>>, vector<1024x64xbf16>
    %cst_14 = arith.constant dense<0.000000e+00> : vector<4x64xf32>
    %13 = tpu.matmul %11, %12, %cst_14 {dimension_numbers = #tpu.dot_dimension_numbers<[1], [0], [0], [1], [0, 0, 1, 1], [], []>} : vector<4x1024xbf16>, vector<1024x64xbf16>, vector<4x64xf32> -> vector<4x64xf32>
    %c0_15 = arith.constant 0 : index
    %c0_16 = arith.constant 0 : index
    %14 = vector.load %arg6[%c0_15, %c0_16] : memref<1x64xf32, #tpu.memory_space<vmem>>, vector<1x64xf32>
    %15 = vector.broadcast %14 : vector<1x64xf32> to vector<4x64xf32>
    %16 = arith.addf %13, %15 : vector<4x64xf32>
    %cst_17 = arith.constant 0.000000e+00 : f32
    %17 = vector.broadcast %cst_17 : f32 to vector<4x64xf32>
    %18 = arith.maximumf %16, %17 : vector<4x64xf32>
    %c0_18 = arith.constant 0 : index
    %c0_19 = arith.constant 0 : index
    %19 = vector.load %arg7[%c0_18, %c0_19] : memref<4x64xf32, #tpu.memory_space<vmem>>, vector<4x64xf32>
    %20 = arith.mulf %18, %19 : vector<4x64xf32>
    %cst_20 = arith.constant dense<0.000000e+00> : vector<4xf32>
    %21 = vector.multi_reduction <add>, %20, %cst_20 [1] : vector<4x64xf32> to vector<4xf32>
    %c0_21 = arith.constant 0 : index
    %22 = memref.load %arg8[%c0_21] : memref<1xf32, #tpu.memory_space<smem>>
    %23 = vector.broadcast %22 : f32 to vector<4xf32>
    %24 = arith.addf %21, %23 : vector<4xf32>
    %25 = vector.shape_cast %24 : vector<4xf32> to vector<1x4xf32>
    %c0_22 = arith.constant 0 : index
    %c0_23 = arith.constant 0 : index
    %26 = vector.load %arg9[%c0_22, %c0_23] : memref<1x4xf32, #tpu.memory_space<vmem>>, vector<1x4xf32>
    tpu.vector_store %arg9[%c0_22, %c0_23], %25 {strides = array<i32>} : memref<1x4xf32, #tpu.memory_space<vmem>>, vector<1x4xf32>,
    return
  }
  func.func @transform_0(%arg0: i32) -> (i32, i32) {
    %c0_i32 = arith.constant 0 : i32
    %c0_i32_0 = arith.constant 0 : i32
    %c0_i32_1 = arith.constant 0 : i32
    return %c0_i32, %c0_i32_0 : i32, i32
  }
  func.func @transform_1(%arg0: i32) -> (i32, i32) {
    %c0_i32 = arith.constant 0 : i32
    %c0_i32_0 = arith.constant 0 : i32
    %c0_i32_1 = arith.constant 0 : i32
    return %c0_i32, %c0_i32_0 : i32, i32
  }
  func.func @transform_2(%arg0: i32) -> (i32, i32) {
    %c0_i32 = arith.constant 0 : i32
    %c0_i32_0 = arith.constant 0 : i32
    %c0_i32_1 = arith.constant 0 : i32
    return %c0_i32, %c0_i32_0 : i32, i32
  }
  func.func @transform_3(%arg0: i32) -> (i32, i32) {
    %c0_i32 = arith.constant 0 : i32
    %c0_i32_0 = arith.constant 0 : i32
    %c0_i32_1 = arith.constant 0 : i32
    return %c0_i32, %c0_i32_0 : i32, i32
  }
  func.func @transform_4(%arg0: i32) -> (i32, i32) {
    %c0_i32 = arith.constant 0 : i32
    %c0_i32_0 = arith.constant 0 : i32
    %c0_i32_1 = arith.constant 0 : i32
    return %c0_i32, %c0_i32_0 : i32, i32
  }
  func.func @transform_5(%arg0: i32) -> (i32, i32) {
    %c0_i32 = arith.constant 0 : i32
    %c0_i32_0 = arith.constant 0 : i32
    %c0_i32_1 = arith.constant 0 : i32
    return %c0_i32, %c0_i32_0 : i32, i32
  }
  func.func @transform_6(%arg0: i32) -> (i32, i32) {
    %c0_i32 = arith.constant 0 : i32
    %c0_i32_0 = arith.constant 0 : i32
    %c0_i32_1 = arith.constant 0 : i32
    return %c0_i32, %c0_i32_0 : i32, i32
  }
  func.func @transform_7(%arg0: i32) -> i32 {
    %c0_i32 = arith.constant 0 : i32
    %c0_i32_0 = arith.constant 0 : i32
    return %c0_i32 : i32
  }
  func.func @transform_8(%arg0: i32) -> (i32, i32) {
    %c0_i32 = arith.constant 0 : i32
    %c0_i32_0 = arith.constant 0 : i32
    %c0_i32_1 = arith.constant 0 : i32
    return %c0_i32, %c0_i32_0 : i32, i32
  }
}

</mosaic_0001>

<llo_original>
// kernel: _lambda_.1
$region0: #{_lambda_.1}
  #allocation0 [shape = 'u32[]', space=smem, size = 0x4, offset = 0x4, fixed_abs, tag = 'smem constant byte address 0x4 - core index']
  #allocation1 [shape = 'u32[144,128]{1,0:T(1,128)}', space=vmem, size = 0x12000, scoped, tag = 'internal scratch']
  #allocation2 [shape = 'bf16[4,1024]{1,0:T(4,128)(2,1)}', space=vmem, size = 0x2000, scoped, tag = 'scratch operand']
  #allocation3 [shape = 'f32[1]{0:T(128)S(6)}', space=smem, size = 0x200, scoped, tag = 'scoped memory for _lambda_.1']
  %s0 = inlined_call_operand.vmem [shape: bf16[2,48], index: 0, kind: input, shape index: {}]
  %s1 = inlined_call_operand.vmem [shape: bf16[48,1024], index: 1, kind: input, shape index: {}]
  %s2 = inlined_call_operand.vmem [shape: f32[1,1024], index: 2, kind: input, shape index: {}]
  %s3 = inlined_call_operand.vmem [shape: bf16[2,1024], index: 3, kind: input, shape index: {}]
  %s4 = inlined_call_operand.vmem [shape: bf16[1024,64], index: 4, kind: input, shape index: {}]
  %s5 = inlined_call_operand.vmem [shape: f32[1,64], index: 5, kind: input, shape index: {}]
  %s6 = inlined_call_operand.vmem [shape: f32[4,64], index: 6, kind: input, shape index: {}]
  %s7 = inlined_call_operand.<no memory space> [shape: f32[1], index: 7, kind: input, shape index: {}]
  %s8 = inlined_call_operand.vmem [shape: f32[1,4], index: 8, kind: output, shape index: {}]
  %s9 = sld [smem:[#allocation0]]
  $region42: #{_lambda_.1} parent=0
    _
  %s11 = ssub.s32 1, %s9
  %s12 = scalar_select 0, %s11, %s9
  %13 = sst [smem:[#allocation3]] %s7
  // Predicated region
  $region2: #{_lambda_.1} parent=0 // pred_check
    _
  $region3: #{_lambda_.1} parent=0 // pred_check_branch
    %15 = sbr.rel (0) target = $region5
  $region4: #{_lambda_.1} parent=0 // pred_region
    _
  $region5: #{_lambda_.1} parent=0 // pred_fallthru
    _
  // Predicated region
  $region6: #{_lambda_.1} parent=0 // pred_check
    _
  $region7: #{_lambda_.1} parent=0 // pred_check_branch
    %17 = sbr.rel (0) target = $region9
  $region8: #{_lambda_.1} parent=0 // pred_region
    _
  $region9: #{_lambda_.1} parent=0 // pred_fallthru
    _
  // Predicated region
  $region10: #{_lambda_.1} parent=0 // pred_check
    _
  $region11: #{_lambda_.1} parent=0 // pred_check_branch
    %19 = sbr.rel (0) target = $region13
  $region12: #{_lambda_.1} parent=0 // pred_region
    _
  $region13: #{_lambda_.1} parent=0 // pred_fallthru
    _
  // Predicated region
  $region14: #{_lambda_.1} parent=0 // pred_check
    _
  $region15: #{_lambda_.1} parent=0 // pred_check_branch
    %21 = sbr.rel (0) target = $region17
  $region16: #{_lambda_.1} parent=0 // pred_region
    _
  $region17: #{_lambda_.1} parent=0 // pred_fallthru
    _
  // Predicated region
  $region18: #{_lambda_.1} parent=0 // pred_check
    _
  $region19: #{_lambda_.1} parent=0 // pred_check_branch
    %23 = sbr.rel (0) target = $region21
  $region20: #{_lambda_.1} parent=0 // pred_region
    _
  $region21: #{_lambda_.1} parent=0 // pred_fallthru
    _
  // Predicated region
  $region22: #{_lambda_.1} parent=0 // pred_check
    _
  $region23: #{_lambda_.1} parent=0 // pred_check_branch
    %25 = sbr.rel (0) target = $region25
  $region24: #{_lambda_.1} parent=0 // pred_region
    _
  $region25: #{_lambda_.1} parent=0 // pred_fallthru
    _
  // Predicated region
  $region26: #{_lambda_.1} parent=0 // pred_check
    _
  $region27: #{_lambda_.1} parent=0 // pred_check_branch
    %27 = sbr.rel (0) target = $region29
  $region28: #{_lambda_.1} parent=0 // pred_region
    _
  $region29: #{_lambda_.1} parent=0 // pred_fallthru
    _
  // Predicated region
  $region30: #{_lambda_.1} parent=0 // pred_check
    _
  $region31: #{_lambda_.1} parent=0 // pred_check_branch
    %29 = sbr.rel (0) target = $region33
  $region32: #{_lambda_.1} parent=0 // pred_region
    _
  $region33: #{_lambda_.1} parent=0 // pred_fallthru
    _
  %v31 = vld [vmem:[%s0] sm:$0x1]
  %v32 = vld [vmem:[%s1] sm:$0xff]
  %v33 = vld [vmem:[%s1 + $0x8] sm:$0xff]
  %v34 = vld [vmem:[%s1 + $0x10] sm:$0xff]
  %v35 = vld [vmem:[%s1 + $0x18] sm:$0xff]
  %v36 = vld [vmem:[%s1 + $0x20] sm:$0xff]
  %v37 = vld [vmem:[%s1 + $0x28] sm:$0xff]
  %v38 = vld [vmem:[%s1 + $0x30] sm:$0xff]
  %v39 = vld [vmem:[%s1 + $0x38] sm:$0xff]
  %v40 = vld [vmem:[%s1 + $0x40] sm:$0xff]
  %v41 = vld [vmem:[%s1 + $0x48] sm:$0xff]
  %v42 = vld [vmem:[%s1 + $0x50] sm:$0xff]
  %v43 = vld [vmem:[%s1 + $0x58] sm:$0xff]
  %v44 = vld [vmem:[%s1 + $0x60] sm:$0xff]
  %v45 = vld [vmem:[%s1 + $0x68] sm:$0xff]
  %v46 = vld [vmem:[%s1 + $0x70] sm:$0xff]
  %v47 = vld [vmem:[%s1 + $0x78] sm:$0xff]
  %v48 = vld [vmem:[%s1 + $0x80] sm:$0xff]
  %v49 = vld [vmem:[%s1 + $0x88] sm:$0xff]
  %v50 = vld [vmem:[%s1 + $0x90] sm:$0xff]
  %v51 = vld [vmem:[%s1 + $0x98] sm:$0xff]
  %v52 = vld [vmem:[%s1 + $0xa0] sm:$0xff]
  %v53 = vld [vmem:[%s1 + $0xa8] sm:$0xff]
  %v54 = vld [vmem:[%s1 + $0xb0] sm:$0xff]
  %v55 = vld [vmem:[%s1 + $0xb8] sm:$0xff]
  %v56 = vld [vmem:[%s2] sm:$0xff]
  %v58 = vlaneseq
  %v59 = vshrl.u32 %v58, 7
  %v60 = vsub.s32 0, %v59
  %v61 = vrot.slane %v56, %v60
  %v62 = vlaneseq
  %v63 = vshrl.u32 %v62, 7
  %v64 = vsub.s32 1, %v63
  %v65 = vrot.slane %v56, %v64
  %v66 = vlaneseq
  %v67 = vshrl.u32 %v66, 7
  %v68 = vsub.s32 2, %v67
  %v69 = vrot.slane %v56, %v68
  %v70 = vlaneseq
  %v71 = vshrl.u32 %v70, 7
  %v72 = vsub.s32 3, %v71
  %v73 = vrot.slane %v56, %v72
  %v74 = vlaneseq
  %v75 = vshrl.u32 %v74, 7
  %v76 = vsub.s32 4, %v75
  %v77 = vrot.slane %v56, %v76
  %v78 = vlaneseq
  %v79 = vshrl.u32 %v78, 7
  %v80 = vsub.s32 5, %v79
  %v81 = vrot.slane %v56, %v80
  %v82 = vlaneseq
  %v83 = vshrl.u32 %v82, 7
  %v84 = vsub.s32 6, %v83
  %v85 = vrot.slane %v56, %v84
  %v86 = vlaneseq
  %v87 = vshrl.u32 %v86, 7
  %v88 = vsub.s32 7, %v87
  %v89 = vrot.slane %v56, %v88
  %v122 = vunpack.c.l.b16 %v32
  %v123 = vunpack.c.h.b16 %v32
  %v124 = vunpack.c.l.b16 %v33
  %v125 = vunpack.c.h.b16 %v33
  %v126 = vunpack.c.l.b16 %v34
  %v127 = vunpack.c.h.b16 %v34
  %v128 = vunpack.c.l.b16 %v35
  %v129 = vunpack.c.h.b16 %v35
  %v130 = vunpack.c.l.b16 %v36
  %v131 = vunpack.c.h.b16 %v36
  %v132 = vunpack.c.l.b16 %v37
  %v133 = vunpack.c.h.b16 %v37
  %v134 = vunpack.c.l.b16 %v38
  %v135 = vunpack.c.h.b16 %v38
  %v136 = vunpack.c.l.b16 %v39
  %v137 = vunpack.c.h.b16 %v39
  %v138 = vunpack.c.l.b16 %v40
  %v139 = vunpack.c.h.b16 %v40
  %v140 = vunpack.c.l.b16 %v41
  %v141 = vunpack.c.h.b16 %v41
  %v142 = vunpack.c.l.b16 %v42
  %v143 = vunpack.c.h.b16 %v42
  %v144 = vunpack.c.l.b16 %v43
  %v145 = vunpack.c.h.b16 %v43
  %v146 = vunpack.c.l.b16 %v44
  %v147 = vunpack.c.h.b16 %v44
  %v148 = vunpack.c.l.b16 %v45
  %v149 = vunpack.c.h.b16 %v45
  %v150 = vunpack.c.l.b16 %v46
  %v151 = vunpack.c.h.b16 %v46
  %v152 = vunpack.c.l.b16 %v47
  %v153 = vunpack.c.h.b16 %v47
  %v154 = vunpack.c.l.b16 %v48
  %v155 = vunpack.c.h.b16 %v48
  %v156 = vunpack.c.l.b16 %v49
  %v157 = vunpack.c.h.b16 %v49
  %v158 = vunpack.c.l.b16 %v50
  %v159 = vunpack.c.h.b16 %v50
  %v160 = vunpack.c.l.b16 %v51
  %v161 = vunpack.c.h.b16 %v51
  %v162 = vunpack.c.l.b16 %v52
  %v163 = vunpack.c.h.b16 %v52
  %v164 = vunpack.c.l.b16 %v53
  %v165 = vunpack.c.h.b16 %v53
  %v166 = vunpack.c.l.b16 %v54
  %v167 = vunpack.c.h.b16 %v54
  %v168 = vunpack.c.l.b16 %v55
  %v169 = vunpack.c.h.b16 %v55
  %v170 = vpack.c.b16 %v130, %v122
  %v171 = vpack.c.b16 %v131, %v123
  %v172 = vpack.c.b16 %v132, %v124
  %v173 = vpack.c.b16 %v133, %v125
  %v174 = vpack.c.b16 %v134, %v126
  %v175 = vpack.c.b16 %v135, %v127
  %v176 = vpack.c.b16 %v136, %v128
  %v177 = vpack.c.b16 %v137, %v129
  %v178 = vpack.c.b16 %v146, %v138
  %v179 = vpack.c.b16 %v147, %v139
  %v180 = vpack.c.b16 %v148, %v140
  %v181 = vpack.c.b16 %v149, %v141
  %v182 = vpack.c.b16 %v150, %v142
  %v183 = vpack.c.b16 %v151, %v143
  %v184 = vpack.c.b16 %v152, %v144
  %v185 = vpack.c.b16 %v153, %v145
  %v186 = vpack.c.b16 %v162, %v154
  %v187 = vpack.c.b16 %v163, %v155
  %v188 = vpack.c.b16 %v164, %v156
  %v189 = vpack.c.b16 %v165, %v157
  %v190 = vpack.c.b16 %v166, %v158
  %v191 = vpack.c.b16 %v167, %v159
  %v192 = vpack.c.b16 %v168, %v160
  %v193 = vpack.c.b16 %v169, %v161
  %vm218 = vcmask 392192
  %v220 = vsel %vm218, %v31, 0
  %222 = vmatprep.subr.bf16.mxu0 %v171
  %223 = vmatpush1.bf16.msra.mxu0 %v170
  %224 = vmatprep.subr.bf16.mxu0 %v179
  %225 = vmatpush1.bf16.msra.mxu0 %v178
  %226 = vmatprep.subr.bf16.mxu0 %v187
  %227 = vmatpush1.bf16.msra.mxu0 %v186
  %228 = vmatprep.subr.bf16.mxu0 0
  %229 = vmatpush1.bf16.msra.mxu0 0
  %230 = vmatprep.subr.bf16.mxu0 0
  %231 = vmatpush1.bf16.msra.mxu0 0
  %232 = vmatprep.subr.bf16.mxu0 0
  %233 = vmatpush1.bf16.msra.mxu0 0
  %234 = vmatprep.subr.bf16.mxu0 0
  %235 = vmatpush1.bf16.msra.mxu0 0
  %236 = vmatprep.subr.bf16.mxu0 0
  %237 = vmatpush1.bf16.msra.mxu0 0
  %238 = vmatprep.subr.bf16.mxu0 0
  %239 = vmatpush1.bf16.msra.mxu0 0
  %240 = vmatprep.subr.bf16.mxu0 0
  %241 = vmatpush1.bf16.msra.mxu0 0
  %242 = vmatprep.subr.bf16.mxu0 0
  %243 = vmatpush1.bf16.msra.mxu0 0
  %244 = vmatprep.subr.bf16.mxu0 0
  %245 = vmatpush1.bf16.msra.mxu0 0
  %246 = vmatprep.subr.bf16.mxu0 0
  %247 = vmatpush1.bf16.msra.mxu0 0
  %248 = vmatprep.subr.bf16.mxu0 0
  %249 = vmatpush1.bf16.msra.mxu0 0
  %250 = vmatprep.subr.bf16.mxu0 0
  %251 = vmatpush1.bf16.msra.mxu0 0
  %252 = vmatprep.subr.bf16.mxu0 0
  %253 = vmatpush1.bf16.msra.mxu0 0
  %254 = vmatprep.mubr.bf16.mxu0 0
  %255 = vmatmul.mubr.bf16.gmra.mrb[0].mxu0 %v220
  %v256 = vpop.f32.mrb[0].mxu0
  %v257 = vadd.f32 %v61, %v256
  %v258 = vpop.f32.mrb[0].mxu0
  %v259 = vadd.f32 %v65, %v258
  %v260 = vpop.f32.mrb[0].mxu0
  %v261 = vpop.f32.mrb[0].mxu0
  %262 = vdwg.mxu0
  %263 = vmatprep.subr.bf16.mxu0 %v173
  %264 = vmatpush1.bf16.msra.mxu0 %v172
  %265 = vmatprep.subr.bf16.mxu0 %v181
  %266 = vmatpush1.bf16.msra.mxu0 %v180
  %267 = vmatprep.subr.bf16.mxu0 %v189
  %268 = vmatpush1.bf16.msra.mxu0 %v188
  %269 = vmatprep.subr.bf16.mxu0 0
  %270 = vmatpush1.bf16.msra.mxu0 0
  %271 = vmatprep.subr.bf16.mxu0 0
  %272 = vmatpush1.bf16.msra.mxu0 0
  %273 = vmatprep.subr.bf16.mxu0 0
  %274 = vmatpush1.bf16.msra.mxu0 0
  %275 = vmatprep.subr.bf16.mxu0 0
  %276 = vmatpush1.bf16.msra.mxu0 0
  %277 = vmatprep.subr.bf16.mxu0 0
  %278 = vmatpush1.bf16.msra.mxu0 0
  %279 = vmatprep.subr.bf16.mxu0 0
  %280 = vmatpush1.bf16.msra.mxu0 0
  %281 = vmatprep.subr.bf16.mxu0 0
  %282 = vmatpush1.bf16.msra.mxu0 0
  %283 = vmatprep.subr.bf16.mxu0 0
  %284 = vmatpush1.bf16.msra.mxu0 0
  %285 = vmatprep.subr.bf16.mxu0 0
  %286 = vmatpush1.bf16.msra.mxu0 0
  %287 = vmatprep.subr.bf16.mxu0 0
  %288 = vmatpush1.bf16.msra.mxu0 0
  %289 = vmatprep.subr.bf16.mxu0 0
  %290 = vmatpush1.bf16.msra.mxu0 0
  %291 = vmatprep.subr.bf16.mxu0 0
  %292 = vmatpush1.bf16.msra.mxu0 0
  %293 = vmatprep.subr.bf16.mxu0 0
  %294 = vmatpush1.bf16.msra.mxu0 0
  %295 = vmatprep.mubr.bf16.mxu0 0
  %296 = vmatmul.mubr.bf16.gmra.mrb[0].mxu0 %v220
  %v297 = vpop.f32.mrb[0].mxu0
  %v298 = vadd.f32 %v69, %v297
  %v299 = vpop.f32.mrb[0].mxu0
  %v300 = vadd.f32 %v73, %v299
  %v301 = vpop.f32.mrb[0].mxu0
  %v302 = vpop.f32.mrb[0].mxu0
  %303 = vdwg.mxu0
  %304 = vmatprep.subr.bf16.mxu0 %v175
  %305 = vmatpush1.bf16.msra.mxu0 %v174
  %306 = vmatprep.subr.bf16.mxu0 %v183
  %307 = vmatpush1.bf16.msra.mxu0 %v182
  %308 = vmatprep.subr.bf16.mxu0 %v191
  %309 = vmatpush1.bf16.msra.mxu0 %v190
  %310 = vmatprep.subr.bf16.mxu0 0
  %311 = vmatpush1.bf16.msra.mxu0 0
  %312 = vmatprep.subr.bf16.mxu0 0
  %313 = vmatpush1.bf16.msra.mxu0 0
  %314 = vmatprep.subr.bf16.mxu0 0
  %315 = vmatpush1.bf16.msra.mxu0 0
  %316 = vmatprep.subr.bf16.mxu0 0
  %317 = vmatpush1.bf16.msra.mxu0 0
  %318 = vmatprep.subr.bf16.mxu0 0
  %319 = vmatpush1.bf16.msra.mxu0 0
  %320 = vmatprep.subr.bf16.mxu0 0
  %321 = vmatpush1.bf16.msra.mxu0 0
  %322 = vmatprep.subr.bf16.mxu0 0
  %323 = vmatpush1.bf16.msra.mxu0 0
  %324 = vmatprep.subr.bf16.mxu0 0
  %325 = vmatpush1.bf16.msra.mxu0 0
  %326 = vmatprep.subr.bf16.mxu0 0
  %327 = vmatpush1.bf16.msra.mxu0 0
  %328 = vmatprep.subr.bf16.mxu0 0
  %329 = vmatpush1.bf16.msra.mxu0 0
  %330 = vmatprep.subr.bf16.mxu0 0
  %331 = vmatpush1.bf16.msra.mxu0 0
  %332 = vmatprep.subr.bf16.mxu0 0
  %333 = vmatpush1.bf16.msra.mxu0 0
  %334 = vmatprep.subr.bf16.mxu0 0
  %335 = vmatpush1.bf16.msra.mxu0 0
  %336 = vmatprep.mubr.bf16.mxu0 0
  %337 = vmatmul.mubr.bf16.gmra.mrb[0].mxu0 %v220
  %v338 = vpop.f32.mrb[0].mxu0
  %v339 = vadd.f32 %v77, %v338
  %v340 = vpop.f32.mrb[0].mxu0
  %v341 = vadd.f32 %v81, %v340
  %v342 = vpop.f32.mrb[0].mxu0
  %v343 = vpop.f32.mrb[0].mxu0
  %344 = vdwg.mxu0
  %345 = vmatprep.subr.bf16.mxu0 %v177
  %346 = vmatpush1.bf16.msra.mxu0 %v176
  %347 = vmatprep.subr.bf16.mxu0 %v185
  %348 = vmatpush1.bf16.msra.mxu0 %v184
  %349 = vmatprep.subr.bf16.mxu0 %v193
  %350 = vmatpush1.bf16.msra.mxu0 %v192
  %351 = vmatprep.subr.bf16.mxu0 0
  %352 = vmatpush1.bf16.msra.mxu0 0
  %353 = vmatprep.subr.bf16.mxu0 0
  %354 = vmatpush1.bf16.msra.mxu0 0
  %355 = vmatprep.subr.bf16.mxu0 0
  %356 = vmatpush1.bf16.msra.mxu0 0
  %357 = vmatprep.subr.bf16.mxu0 0
  %358 = vmatpush1.bf16.msra.mxu0 0
  %359 = vmatprep.subr.bf16.mxu0 0
  %360 = vmatpush1.bf16.msra.mxu0 0
  %361 = vmatprep.subr.bf16.mxu0 0
  %362 = vmatpush1.bf16.msra.mxu0 0
  %363 = vmatprep.subr.bf16.mxu0 0
  %364 = vmatpush1.bf16.msra.mxu0 0
  %365 = vmatprep.subr.bf16.mxu0 0
  %366 = vmatpush1.bf16.msra.mxu0 0
  %367 = vmatprep.subr.bf16.mxu0 0
  %368 = vmatpush1.bf16.msra.mxu0 0
  %369 = vmatprep.subr.bf16.mxu0 0
  %370 = vmatpush1.bf16.msra.mxu0 0
  %371 = vmatprep.subr.bf16.mxu0 0
  %372 = vmatpush1.bf16.msra.mxu0 0
  %373 = vmatprep.subr.bf16.mxu0 0
  %374 = vmatpush1.bf16.msra.mxu0 0
  %375 = vmatprep.subr.bf16.mxu0 0
  %376 = vmatpush1.bf16.msra.mxu0 0
  %377 = vmatprep.mubr.bf16.mxu0 0
  %378 = vmatmul.mubr.bf16.gmra.mrb[0].mxu0 %v220
  %v379 = vpop.f32.mrb[0].mxu0
  %v380 = vadd.f32 %v85, %v379
  %v381 = vpop.f32.mrb[0].mxu0
  %v382 = vadd.f32 %v89, %v381
  %v383 = vpop.f32.mrb[0].mxu0
  %v384 = vpop.f32.mrb[0].mxu0
  %385 = vdwg.mxu0
  %v386 = vtanh.pop %v257
  %v387 = vtanh.pop %v259
  %v388 = vtanh.pop %v298
  %v389 = vtanh.pop %v300
  %v390 = vtanh.pop %v339
  %v391 = vtanh.pop %v341
  %v392 = vtanh.pop %v380
  %v393 = vtanh.pop %v382
  %v394 = vpack.c.bf16 %v386, %v386
  %v395 = vpack.c.bf16 %v387, %v387
  %v396 = vpack.c.bf16 %v388, %v388
  %v397 = vpack.c.bf16 %v389, %v389
  %v398 = vpack.c.bf16 %v390, %v390
  %v399 = vpack.c.bf16 %v391, %v391
  %v400 = vpack.c.bf16 %v392, %v392
  %v401 = vpack.c.bf16 %v393, %v393
  %v410 = vcombine.low %v394, %v395
  %v411 = vcombine.low %v396, %v397
  %v413 = vunpack.c.l.s4 1983009808
  %v414 = vunpack.c.0.s8 %v413
  %v415 = vlaneseq
  %v416 = vshrl.u32 %v415, 7
  %v417 = vsub.s32 %v414, %v416
  %v418 = vrot.slane %v410, %v417
  %v420 = vunpack.c.l.s4 1983009808
  %v421 = vunpack.c.0.s8 %v420
  %v422 = vlaneseq
  %v423 = vshrl.u32 %v422, 7
  %v424 = vsub.s32 %v421, %v423
  %v425 = vrot.slane %v411, %v424
  %v426 = vcombine.low %v418, %v425
  %v427 = vcombine.low %v398, %v399
  %v428 = vcombine.low %v400, %v401
  %v430 = vunpack.c.l.s4 1983009808
  %v431 = vunpack.c.0.s8 %v430
  %v432 = vlaneseq
  %v433 = vshrl.u32 %v432, 7
  %v434 = vsub.s32 %v431, %v433
  %v435 = vrot.slane %v427, %v434
  %v437 = vunpack.c.l.s4 1983009808
  %v438 = vunpack.c.0.s8 %v437
  %v439 = vlaneseq
  %v440 = vshrl.u32 %v439, 7
  %v441 = vsub.s32 %v438, %v440
  %v442 = vrot.slane %v428, %v441
  %v443 = vcombine.low %v435, %v442
  %446 = vst [vmem:[#allocation2] sm:$0x55] %v426
  %447 = vst [vmem:[#allocation2 + $0x8] sm:$0x55] %v443
  %v448 = vld [vmem:[%s3] sm:$0xff]
  %v450 = vcombine.low %v448, %v448
  %v452 = vunpack.c.l.s4 1935823168
  %v453 = vunpack.c.0.s8 %v452
  %v454 = vlaneseq
  %v455 = vshrl.u32 %v454, 7
  %v456 = vsub.s32 %v453, %v455
  %v457 = vrot.slane %v450, %v456
  %v459 = vunpack.c.l.s4 1935823168
  %v460 = vunpack.c.0.s8 %v459
  %v461 = vlaneseq
  %v462 = vshrl.u32 %v461, 7
  %v463 = vsub.s32 %v460, %v462
  %v464 = vrot.slane %v448, %v463
  %467 = vst [vmem:[#allocation2] sm:$0xaa] %v457
  %468 = vst [vmem:[#allocation2 + $0x8] sm:$0xaa] %v464
  %v469 = vld [vmem:[#allocation2] sm:$0xff]
  %v470 = vld [vmem:[#allocation2 + $0x8] sm:$0xff]
  %v471 = vld [vmem:[%s4] sm:$0xf]
  %v472 = vld [vmem:[%s4 + $0x4] sm:$0xf]
  %v473 = vld [vmem:[%s4 + $0x8] sm:$0xf]
  %v474 = vld [vmem:[%s4 + $0xc] sm:$0xf]
  %v475 = vld [vmem:[%s4 + $0x10] sm:$0xf]
  %v476 = vld [vmem:[%s4 + $0x14] sm:$0xf]
  %v477 = vld [vmem:[%s4 + $0x18] sm:$0xf]
  %v478 = vld [vmem:[%s4 + $0x1c] sm:$0xf]
  %v479 = vld [vmem:[%s4 + $0x20] sm:$0xf]
  %v480 = vld [vmem:[%s4 + $0x24] sm:$0xf]
  %v481 = vld [vmem:[%s4 + $0x28] sm:$0xf]
  %v482 = vld [vmem:[%s4 + $0x2c] sm:$0xf]
  %v483 = vld [vmem:[%s4 + $0x30] sm:$0xf]
  %v484 = vld [vmem:[%s4 + $0x34] sm:$0xf]
  %v485 = vld [vmem:[%s4 + $0x38] sm:$0xf]
  %v486 = vld [vmem:[%s4 + $0x3c] sm:$0xf]
  %v487 = vld [vmem:[%s4 + $0x40] sm:$0xf]
  %v488 = vld [vmem:[%s4 + $0x44] sm:$0xf]
  %v489 = vld [vmem:[%s4 + $0x48] sm:$0xf]
  %v490 = vld [vmem:[%s4 + $0x4c] sm:$0xf]
  %v491 = vld [vmem:[%s4 + $0x50] sm:$0xf]
  %v492 = vld [vmem:[%s4 + $0x54] sm:$0xf]
  %v493 = vld [vmem:[%s4 + $0x58] sm:$0xf]
  %v494 = vld [vmem:[%s4 + $0x5c] sm:$0xf]
  %v495 = vld [vmem:[%s4 + $0x60] sm:$0xf]
  %v496 = vld [vmem:[%s4 + $0x64] sm:$0xf]
  %v497 = vld [vmem:[%s4 + $0x68] sm:$0xf]
  %v498 = vld [vmem:[%s4 + $0x6c] sm:$0xf]
  %v499 = vld [vmem:[%s4 + $0x70] sm:$0xf]
  %v500 = vld [vmem:[%s4 + $0x74] sm:$0xf]
  %v501 = vld [vmem:[%s4 + $0x78] sm:$0xf]
  %v502 = vld [vmem:[%s4 + $0x7c] sm:$0xf]
  %v503 = vld [vmem:[%s4 + $0x80] sm:$0xf]
  %v504 = vld [vmem:[%s4 + $0x84] sm:$0xf]
  %v505 = vld [vmem:[%s4 + $0x88] sm:$0xf]
  %v506 = vld [vmem:[%s4 + $0x8c] sm:$0xf]
  %v507 = vld [vmem:[%s4 + $0x90] sm:$0xf]
  %v508 = vld [vmem:[%s4 + $0x94] sm:$0xf]
  %v509 = vld [vmem:[%s4 + $0x98] sm:$0xf]
  %v510 = vld [vmem:[%s4 + $0x9c] sm:$0xf]
  %v511 = vld [vmem:[%s4 + $0xa0] sm:$0xf]
  %v512 = vld [vmem:[%s4 + $0xa4] sm:$0xf]
  %v513 = vld [vmem:[%s4 + $0xa8] sm:$0xf]
  %v514 = vld [vmem:[%s4 + $0xac] sm:$0xf]
  %v515 = vld [vmem:[%s4 + $0xb0] sm:$0xf]
  %v516 = vld [vmem:[%s4 + $0xb4] sm:$0xf]
  %v517 = vld [vmem:[%s4 + $0xb8] sm:$0xf]
  %v518 = vld [vmem:[%s4 + $0xbc] sm:$0xf]
  %v519 = vld [vmem:[%s4 + $0xc0] sm:$0xf]
  %v520 = vld [vmem:[%s4 + $0xc4] sm:$0xf]
  %v521 = vld [vmem:[%s4 + $0xc8] sm:$0xf]
  %v522 = vld [vmem:[%s4 + $0xcc] sm:$0xf]
  %v523 = vld [vmem:[%s4 + $0xd0] sm:$0xf]
  %v524 = vld [vmem:[%s4 + $0xd4] sm:$0xf]
  %v525 = vld [vmem:[%s4 + $0xd8] sm:$0xf]
  %v526 = vld [vmem:[%s4 + $0xdc] sm:$0xf]
  %v527 = vld [vmem:[%s4 + $0xe0] sm:$0xf]
  %v528 = vld [vmem:[%s4 + $0xe4] sm:$0xf]
  %v529 = vld [vmem:[%s4 + $0xe8] sm:$0xf]
  %v530 = vld [vmem:[%s4 + $0xec] sm:$0xf]
  %v531 = vld [vmem:[%s4 + $0xf0] sm:$0xf]
  %v532 = vld [vmem:[%s4 + $0xf4] sm:$0xf]
  %v533 = vld [vmem:[%s4 + $0xf8] sm:$0xf]
  %v534 = vld [vmem:[%s4 + $0xfc] sm:$0xf]
  %v535 = vld [vmem:[%s4 + $0x100] sm:$0xf]
  %v536 = vld [vmem:[%s4 + $0x104] sm:$0xf]
  %v537 = vld [vmem:[%s4 + $0x108] sm:$0xf]
  %v538 = vld [vmem:[%s4 + $0x10c] sm:$0xf]
  %v539 = vld [vmem:[%s4 + $0x110] sm:$0xf]
  %v540 = vld [vmem:[%s4 + $0x114] sm:$0xf]
  %v541 = vld [vmem:[%s4 + $0x118] sm:$0xf]
  %v542 = vld [vmem:[%s4 + $0x11c] sm:$0xf]
  %v543 = vld [vmem:[%s4 + $0x120] sm:$0xf]
  %v544 = vld [vmem:[%s4 + $0x124] sm:$0xf]
  %v545 = vld [vmem:[%s4 + $0x128] sm:$0xf]
  %v546 = vld [vmem:[%s4 + $0x12c] sm:$0xf]
  %v547 = vld [vmem:[%s4 + $0x130] sm:$0xf]
  %v548 = vld [vmem:[%s4 + $0x134] sm:$0xf]
  %v549 = vld [vmem:[%s4 + $0x138] sm:$0xf]
  %v550 = vld [vmem:[%s4 + $0x13c] sm:$0xf]
  %v551 = vld [vmem:[%s4 + $0x140] sm:$0xf]
  %v552 = vld [vmem:[%s4 + $0x144] sm:$0xf]
  %v553 = vld [vmem:[%s4 + $0x148] sm:$0xf]
  %v554 = vld [vmem:[%s4 + $0x14c] sm:$0xf]
  %v555 = vld [vmem:[%s4 + $0x150] sm:$0xf]
  %v556 = vld [vmem:[%s4 + $0x154] sm:$0xf]
  %v557 = vld [vmem:[%s4 + $0x158] sm:$0xf]
  %v558 = vld [vmem:[%s4 + $0x15c] sm:$0xf]
  %v559 = vld [vmem:[%s4 + $0x160] sm:$0xf]
  %v560 = vld [vmem:[%s4 + $0x164] sm:$0xf]
  %v561 = vld [vmem:[%s4 + $0x168] sm:$0xf]
  %v562 = vld [vmem:[%s4 + $0x16c] sm:$0xf]
  %v563 = vld [vmem:[%s4 + $0x170] sm:$0xf]
  %v564 = vld [vmem:[%s4 + $0x174] sm:$0xf]
  %v565 = vld [vmem:[%s4 + $0x178] sm:$0xf]
  %v566 = vld [vmem:[%s4 + $0x17c] sm:$0xf]
  %v567 = vld [vmem:[%s4 + $0x180] sm:$0xf]
  %v568 = vld [vmem:[%s4 + $0x184] sm:$0xf]
  %v569 = vld [vmem:[%s4 + $0x188] sm:$0xf]
  %v570 = vld [vmem:[%s4 + $0x18c] sm:$0xf]
  %v571 = vld [vmem:[%s4 + $0x190] sm:$0xf]
  %v572 = vld [vmem:[%s4 + $0x194] sm:$0xf]
  %v573 = vld [vmem:[%s4 + $0x198] sm:$0xf]
  %v574 = vld [vmem:[%s4 + $0x19c] sm:$0xf]
  %v575 = vld [vmem:[%s4 + $0x1a0] sm:$0xf]
  %v576 = vld [vmem:[%s4 + $0x1a4] sm:$0xf]
  %v577 = vld [vmem:[%s4 + $0x1a8] sm:$0xf]
  %v578 = vld [vmem:[%s4 + $0x1ac] sm:$0xf]
  %v579 = vld [vmem:[%s4 + $0x1b0] sm:$0xf]
  %v580 = vld [vmem:[%s4 + $0x1b4] sm:$0xf]
  %v581 = vld [vmem:[%s4 + $0x1b8] sm:$0xf]
  %v582 = vld [vmem:[%s4 + $0x1bc] sm:$0xf]
  %v583 = vld [vmem:[%s4 + $0x1c0] sm:$0xf]
  %v584 = vld [vmem:[%s4 + $0x1c4] sm:$0xf]
  %v585 = vld [vmem:[%s4 + $0x1c8] sm:$0xf]
  %v586 = vld [vmem:[%s4 + $0x1cc] sm:$0xf]
  %v587 = vld [vmem:[%s4 + $0x1d0] sm:$0xf]
  %v588 = vld [vmem:[%s4 + $0x1d4] sm:$0xf]
  %v589 = vld [vmem:[%s4 + $0x1d8] sm:$0xf]
  %v590 = vld [vmem:[%s4 + $0x1dc] sm:$0xf]
  %v591 = vld [vmem:[%s4 + $0x1e0] sm:$0xf]
  %v592 = vld [vmem:[%s4 + $0x1e4] sm:$0xf]
  %v593 = vld [vmem:[%s4 + $0x1e8] sm:$0xf]
  %v594 = vld [vmem:[%s4 + $0x1ec] sm:$0xf]
  %v595 = vld [vmem:[%s4 + $0x1f0] sm:$0xf]
  %v596 = vld [vmem:[%s4 + $0x1f4] sm:$0xf]
  %v597 = vld [vmem:[%s4 + $0x1f8] sm:$0xf]
  %v598 = vld [vmem:[%s4 + $0x1fc] sm:$0xf]
  %v599 = vld [vmem:[%s5] sm:$0x1]
  %v601 = vlaneseq
  %v602 = vshrl.u32 %v601, 7
  %v603 = vsub.s32 0, %v602
  %v604 = vrot.slane %v599, %v603
  %v608 = vcombine.high %v469, %v469
  %v610 = vunpack.c.l.s4 1983009808
  %v611 = vunpack.c.0.s8 %v610
  %v612 = vlaneseq
  %v613 = vshrl.u32 %v612, 7
  %v614 = vsub.s32 %v611, %v613
  %v615 = vrot.slane %v469, %v614
  %v617 = vunpack.c.l.s4 1983009808
  %v618 = vunpack.c.0.s8 %v617
  %v619 = vlaneseq
  %v620 = vshrl.u32 %v619, 7
  %v621 = vsub.s32 %v618, %v620
  %v622 = vrot.slane %v608, %v621
  %v623 = vcombine.high %v615, %v615
  %v624 = vcombine.high %v622, %v622
  %v625 = vcombine.high %v470, %v470
  %v627 = vunpack.c.l.s4 1983009808
  %v628 = vunpack.c.0.s8 %v627
  %v629 = vlaneseq
  %v630 = vshrl.u32 %v629, 7
  %v631 = vsub.s32 %v628, %v630
  %v632 = vrot.slane %v470, %v631
  %v634 = vunpack.c.l.s4 1983009808
  %v635 = vunpack.c.0.s8 %v634
  %v636 = vlaneseq
  %v637 = vshrl.u32 %v636, 7
  %v638 = vsub.s32 %v635, %v637
  %v639 = vrot.slane %v625, %v638
  %v640 = vcombine.high %v632, %v632
  %v641 = vcombine.high %v639, %v639
  %v778 = vunpack.c.l.b16 %v471
  %v779 = vunpack.c.l.b16 %v472
  %v780 = vunpack.c.l.b16 %v473
  %v781 = vunpack.c.l.b16 %v474
  %v782 = vunpack.c.l.b16 %v475
  %v783 = vunpack.c.l.b16 %v476
  %v784 = vunpack.c.l.b16 %v477
  %v785 = vunpack.c.l.b16 %v478
  %v786 = vunpack.c.l.b16 %v479
  %v787 = vunpack.c.l.b16 %v480
  %v788 = vunpack.c.l.b16 %v481
  %v789 = vunpack.c.l.b16 %v482
  %v790 = vunpack.c.l.b16 %v483
  %v791 = vunpack.c.l.b16 %v484
  %v792 = vunpack.c.l.b16 %v485
  %v793 = vunpack.c.l.b16 %v486
  %v794 = vunpack.c.l.b16 %v487
  %v795 = vunpack.c.l.b16 %v488
  %v796 = vunpack.c.l.b16 %v489
  %v797 = vunpack.c.l.b16 %v490
  %v798 = vunpack.c.l.b16 %v491
  %v799 = vunpack.c.l.b16 %v492
  %v800 = vunpack.c.l.b16 %v493
  %v801 = vunpack.c.l.b16 %v494
  %v802 = vunpack.c.l.b16 %v495
  %v803 = vunpack.c.l.b16 %v496
  %v804 = vunpack.c.l.b16 %v497
  %v805 = vunpack.c.l.b16 %v498
  %v806 = vunpack.c.l.b16 %v499
  %v807 = vunpack.c.l.b16 %v500
  %v808 = vunpack.c.l.b16 %v501
  %v809 = vunpack.c.l.b16 %v502
  %v810 = vunpack.c.l.b16 %v503
  %v811 = vunpack.c.l.b16 %v504
  %v812 = vunpack.c.l.b16 %v505
  %v813 = vunpack.c.l.b16 %v506
  %v814 = vunpack.c.l.b16 %v507
  %v815 = vunpack.c.l.b16 %v508
  %v816 = vunpack.c.l.b16 %v509
  %v817 = vunpack.c.l.b16 %v510
  %v818 = vunpack.c.l.b16 %v511
  %v819 = vunpack.c.l.b16 %v512
  %v820 = vunpack.c.l.b16 %v513
  %v821 = vunpack.c.l.b16 %v514
  %v822 = vunpack.c.l.b16 %v515
  %v823 = vunpack.c.l.b16 %v516
  %v824 = vunpack.c.l.b16 %v517
  %v825 = vunpack.c.l.b16 %v518
  %v826 = vunpack.c.l.b16 %v519
  %v827 = vunpack.c.l.b16 %v520
  %v828 = vunpack.c.l.b16 %v521
  %v829 = vunpack.c.l.b16 %v522
  %v830 = vunpack.c.l.b16 %v523
  %v831 = vunpack.c.l.b16 %v524
  %v832 = vunpack.c.l.b16 %v525
  %v833 = vunpack.c.l.b16 %v526
  %v834 = vunpack.c.l.b16 %v527
  %v835 = vunpack.c.l.b16 %v528
  %v836 = vunpack.c.l.b16 %v529
  %v837 = vunpack.c.l.b16 %v530
  %v838 = vunpack.c.l.b16 %v531
  %v839 = vunpack.c.l.b16 %v532
  %v840 = vunpack.c.l.b16 %v533
  %v841 = vunpack.c.l.b16 %v534
  %v842 = vunpack.c.l.b16 %v535
  %v843 = vunpack.c.l.b16 %v536
  %v844 = vunpack.c.l.b16 %v537
  %v845 = vunpack.c.l.b16 %v538
  %v846 = vunpack.c.l.b16 %v539
  %v847 = vunpack.c.l.b16 %v540
  %v848 = vunpack.c.l.b16 %v541
  %v849 = vunpack.c.l.b16 %v542
  %v850 = vunpack.c.l.b16 %v543
  %v851 = vunpack.c.l.b16 %v544
  %v852 = vunpack.c.l.b16 %v545
  %v853 = vunpack.c.l.b16 %v546
  %v854 = vunpack.c.l.b16 %v547
  %v855 = vunpack.c.l.b16 %v548
  %v856 = vunpack.c.l.b16 %v549
  %v857 = vunpack.c.l.b16 %v550
  %v858 = vunpack.c.l.b16 %v551
  %v859 = vunpack.c.l.b16 %v552
  %v860 = vunpack.c.l.b16 %v553
  %v861 = vunpack.c.l.b16 %v554
  %v862 = vunpack.c.l.b16 %v555
  %v863 = vunpack.c.l.b16 %v556
  %v864 = vunpack.c.l.b16 %v557
  %v865 = vunpack.c.l.b16 %v558
  %v866 = vunpack.c.l.b16 %v559
  %v867 = vunpack.c.l.b16 %v560
  %v868 = vunpack.c.l.b16 %v561
  %v869 = vunpack.c.l.b16 %v562
  %v870 = vunpack.c.l.b16 %v563
  %v871 = vunpack.c.l.b16 %v564
  %v872 = vunpack.c.l.b16 %v565
  %v873 = vunpack.c.l.b16 %v566
  %v874 = vunpack.c.l.b16 %v567
  %v875 = vunpack.c.l.b16 %v568
  %v876 = vunpack.c.l.b16 %v569
  %v877 = vunpack.c.l.b16 %v570
  %v878 = vunpack.c.l.b16 %v571
  %v879 = vunpack.c.l.b16 %v572
  %v880 = vunpack.c.l.b16 %v573
  %v881 = vunpack.c.l.b16 %v574
  %v882 = vunpack.c.l.b16 %v575
  %v883 = vunpack.c.l.b16 %v576
  %v884 = vunpack.c.l.b16 %v577
  %v885 = vunpack.c.l.b16 %v578
  %v886 = vunpack.c.l.b16 %v579
  %v887 = vunpack.c.l.b16 %v580
  %v888 = vunpack.c.l.b16 %v581
  %v889 = vunpack.c.l.b16 %v582
  %v890 = vunpack.c.l.b16 %v583
  %v891 = vunpack.c.l.b16 %v584
  %v892 = vunpack.c.l.b16 %v585
  %v893 = vunpack.c.l.b16 %v586
  %v894 = vunpack.c.l.b16 %v587
  %v895 = vunpack.c.l.b16 %v588
  %v896 = vunpack.c.l.b16 %v589
  %v897 = vunpack.c.l.b16 %v590
  %v898 = vunpack.c.l.b16 %v591
  %v899 = vunpack.c.l.b16 %v592
  %v900 = vunpack.c.l.b16 %v593
  %v901 = vunpack.c.l.b16 %v594
  %v902 = vunpack.c.l.b16 %v595
  %v903 = vunpack.c.l.b16 %v596
  %v904 = vunpack.c.l.b16 %v597
  %v905 = vunpack.c.l.b16 %v598
  %v906 = vpack.c.b16 %v779, %v778
  %v907 = vpack.c.b16 %v781, %v780
  %v908 = vpack.c.b16 %v783, %v782
  %v909 = vpack.c.b16 %v785, %v784
  %v910 = vpack.c.b16 %v787, %v786
  %v911 = vpack.c.b16 %v789, %v788
  %v912 = vpack.c.b16 %v791, %v790
  %v913 = vpack.c.b16 %v793, %v792
  %v914 = vpack.c.b16 %v795, %v794
  %v915 = vpack.c.b16 %v797, %v796
  %v916 = vpack.c.b16 %v799, %v798
  %v917 = vpack.c.b16 %v801, %v800
  %v918 = vpack.c.b16 %v803, %v802
  %v919 = vpack.c.b16 %v805, %v804
  %v920 = vpack.c.b16 %v807, %v806
  %v921 = vpack.c.b16 %v809, %v808
  %v922 = vpack.c.b16 %v811, %v810
  %v923 = vpack.c.b16 %v813, %v812
  %v924 = vpack.c.b16 %v815, %v814
  %v925 = vpack.c.b16 %v817, %v816
  %v926 = vpack.c.b16 %v819, %v818
  %v927 = vpack.c.b16 %v821, %v820
  %v928 = vpack.c.b16 %v823, %v822
  %v929 = vpack.c.b16 %v825, %v824
  %v930 = vpack.c.b16 %v827, %v826
  %v931 = vpack.c.b16 %v829, %v828
  %v932 = vpack.c.b16 %v831, %v830
  %v933 = vpack.c.b16 %v833, %v832
  %v934 = vpack.c.b16 %v835, %v834
  %v935 = vpack.c.b16 %v837, %v836
  %v936 = vpack.c.b16 %v839, %v838
  %v937 = vpack.c.b16 %v841, %v840
  %v938 = vpack.c.b16 %v843, %v842
  %v939 = vpack.c.b16 %v845, %v844
  %v940 = vpack.c.b16 %v847, %v846
  %v941 = vpack.c.b16 %v849, %v848
  %v942 = vpack.c.b16 %v851, %v850
  %v943 = vpack.c.b16 %v853, %v852
  %v944 = vpack.c.b16 %v855, %v854
  %v945 = vpack.c.b16 %v857, %v856
  %v946 = vpack.c.b16 %v859, %v858
  %v947 = vpack.c.b16 %v861, %v860
  %v948 = vpack.c.b16 %v863, %v862
  %v949 = vpack.c.b16 %v865, %v864
  %v950 = vpack.c.b16 %v867, %v866
  %v951 = vpack.c.b16 %v869, %v868
  %v952 = vpack.c.b16 %v871, %v870
  %v953 = vpack.c.b16 %v873, %v872
  %v954 = vpack.c.b16 %v875, %v874
  %v955 = vpack.c.b16 %v877, %v876
  %v956 = vpack.c.b16 %v879, %v878
  %v957 = vpack.c.b16 %v881, %v880
  %v958 = vpack.c.b16 %v883, %v882
  %v959 = vpack.c.b16 %v885, %v884
  %v960 = vpack.c.b16 %v887, %v886
  %v961 = vpack.c.b16 %v889, %v888
  %v962 = vpack.c.b16 %v891, %v890
  %v963 = vpack.c.b16 %v893, %v892
  %v964 = vpack.c.b16 %v895, %v894
  %v965 = vpack.c.b16 %v897, %v896
  %v966 = vpack.c.b16 %v899, %v898
  %v967 = vpack.c.b16 %v901, %v900
  %v968 = vpack.c.b16 %v903, %v902
  %v969 = vpack.c.b16 %v905, %v904
  %1034 = vmatprep.subr.bf16.mxu0 0
  %1035 = vmatpush1.bf16.msra.mxu0 %v906
  %1036 = vmatprep.subr.bf16.mxu0 0
  %1037 = vmatpush1.bf16.msra.mxu0 %v907
  %1038 = vmatprep.subr.bf16.mxu0 0
  %1039 = vmatpush1.bf16.msra.mxu0 %v908
  %1040 = vmatprep.subr.bf16.mxu0 0
  %1041 = vmatpush1.bf16.msra.mxu0 %v909
  %1042 = vmatprep.subr.bf16.mxu0 0
  %1043 = vmatpush1.bf16.msra.mxu0 %v910
  %1044 = vmatprep.subr.bf16.mxu0 0
  %1045 = vmatpush1.bf16.msra.mxu0 %v911
  %1046 = vmatprep.subr.bf16.mxu0 0
  %1047 = vmatpush1.bf16.msra.mxu0 %v912
  %1048 = vmatprep.subr.bf16.mxu0 0
  %1049 = vmatpush1.bf16.msra.mxu0 %v913
  %1050 = vmatprep.subr.bf16.mxu0 0
  %1051 = vmatpush1.bf16.msra.mxu0 %v914
  %1052 = vmatprep.subr.bf16.mxu0 0
  %1053 = vmatpush1.bf16.msra.mxu0 %v915
  %1054 = vmatprep.subr.bf16.mxu0 0
  %1055 = vmatpush1.bf16.msra.mxu0 %v916
  %1056 = vmatprep.subr.bf16.mxu0 0
  %1057 = vmatpush1.bf16.msra.mxu0 %v917
  %1058 = vmatprep.subr.bf16.mxu0 0
  %1059 = vmatpush1.bf16.msra.mxu0 %v918
  %1060 = vmatprep.subr.bf16.mxu0 0
  %1061 = vmatpush1.bf16.msra.mxu0 %v919
  %1062 = vmatprep.subr.bf16.mxu0 0
  %1063 = vmatpush1.bf16.msra.mxu0 %v920
  %1064 = vmatprep.subr.bf16.mxu0 0
  %1065 = vmatpush1.bf16.msra.mxu0 %v921
  %1066 = vmatprep.mubr.bf16.mxu0 %v623
  %1067 = vmatmul.mubr.bf16.gmra.mrb[0].mxu0 %v615
  %v1068 = vpop.f32.mrb[0].mxu0
  %v1069 = vadd.f32 %v604, %v1068
  %v1070 = vpop.f32.mrb[0].mxu0
  %v1071 = vpop.f32.mrb[0].mxu0
  %v1072 = vpop.f32.mrb[0].mxu0
  %1073 = vdwg.mxu0
  %1074 = vmatprep.subr.bf16.mxu0 0
  %1075 = vmatpush1.bf16.msra.mxu0 %v922
  %1076 = vmatprep.subr.bf16.mxu0 0
  %1077 = vmatpush1.bf16.msra.mxu0 %v923
  %1078 = vmatprep.subr.bf16.mxu0 0
  %1079 = vmatpush1.bf16.msra.mxu0 %v924
  %1080 = vmatprep.subr.bf16.mxu0 0
  %1081 = vmatpush1.bf16.msra.mxu0 %v925
  %1082 = vmatprep.subr.bf16.mxu0 0
  %1083 = vmatpush1.bf16.msra.mxu0 %v926
  %1084 = vmatprep.subr.bf16.mxu0 0
  %1085 = vmatpush1.bf16.msra.mxu0 %v927
  %1086 = vmatprep.subr.bf16.mxu0 0
  %1087 = vmatpush1.bf16.msra.mxu0 %v928
  %1088 = vmatprep.subr.bf16.mxu0 0
  %1089 = vmatpush1.bf16.msra.mxu0 %v929
  %1090 = vmatprep.subr.bf16.mxu0 0
  %1091 = vmatpush1.bf16.msra.mxu0 %v930
  %1092 = vmatprep.subr.bf16.mxu0 0
  %1093 = vmatpush1.bf16.msra.mxu0 %v931
  %1094 = vmatprep.subr.bf16.mxu0 0
  %1095 = vmatpush1.bf16.msra.mxu0 %v932
  %1096 = vmatprep.subr.bf16.mxu0 0
  %1097 = vmatpush1.bf16.msra.mxu0 %v933
  %1098 = vmatprep.subr.bf16.mxu0 0
  %1099 = vmatpush1.bf16.msra.mxu0 %v934
  %1100 = vmatprep.subr.bf16.mxu0 0
  %1101 = vmatpush1.bf16.msra.mxu0 %v935
  %1102 = vmatprep.subr.bf16.mxu0 0
  %1103 = vmatpush1.bf16.msra.mxu0 %v936
  %1104 = vmatprep.subr.bf16.mxu0 0
  %1105 = vmatpush1.bf16.msra.mxu0 %v937
  %1106 = vmatprep.mubr.bf16.mxu0 %v624
  %1107 = vmatmul.mubr.bf16.gmra.mrb[0].mxu0 %v622
  %v1108 = vpop.f32.mrb[0].mxu0
  %v1109 = vadd.f32 %v1069, %v1108
  %v1110 = vpop.f32.mrb[0].mxu0
  %v1111 = vpop.f32.mrb[0].mxu0
  %v1112 = vpop.f32.mrb[0].mxu0
  %1113 = vdwg.mxu0
  %1114 = vmatprep.subr.bf16.mxu0 0
  %1115 = vmatpush1.bf16.msra.mxu0 %v938
  %1116 = vmatprep.subr.bf16.mxu0 0
  %1117 = vmatpush1.bf16.msra.mxu0 %v939
  %1118 = vmatprep.subr.bf16.mxu0 0
  %1119 = vmatpush1.bf16.msra.mxu0 %v940
  %1120 = vmatprep.subr.bf16.mxu0 0
  %1121 = vmatpush1.bf16.msra.mxu0 %v941
  %1122 = vmatprep.subr.bf16.mxu0 0
  %1123 = vmatpush1.bf16.msra.mxu0 %v942
  %1124 = vmatprep.subr.bf16.mxu0 0
  %1125 = vmatpush1.bf16.msra.mxu0 %v943
  %1126 = vmatprep.subr.bf16.mxu0 0
  %1127 = vmatpush1.bf16.msra.mxu0 %v944
  %1128 = vmatprep.subr.bf16.mxu0 0
  %1129 = vmatpush1.bf16.msra.mxu0 %v945
  %1130 = vmatprep.subr.bf16.mxu0 0
  %1131 = vmatpush1.bf16.msra.mxu0 %v946
  %1132 = vmatprep.subr.bf16.mxu0 0
  %1133 = vmatpush1.bf16.msra.mxu0 %v947
  %1134 = vmatprep.subr.bf16.mxu0 0
  %1135 = vmatpush1.bf16.msra.mxu0 %v948
  %1136 = vmatprep.subr.bf16.mxu0 0
  %1137 = vmatpush1.bf16.msra.mxu0 %v949
  %1138 = vmatprep.subr.bf16.mxu0 0
  %1139 = vmatpush1.bf16.msra.mxu0 %v950
  %1140 = vmatprep.subr.bf16.mxu0 0
  %1141 = vmatpush1.bf16.msra.mxu0 %v951
  %1142 = vmatprep.subr.bf16.mxu0 0
  %1143 = vmatpush1.bf16.msra.mxu0 %v952
  %1144 = vmatprep.subr.bf16.mxu0 0
  %1145 = vmatpush1.bf16.msra.mxu0 %v953
  %1146 = vmatprep.mubr.bf16.mxu0 %v640
  %1147 = vmatmul.mubr.bf16.gmra.mrb[0].mxu0 %v632
  %v1148 = vpop.f32.mrb[0].mxu0
  %v1149 = vadd.f32 %v1109, %v1148
  %v1150 = vpop.f32.mrb[0].mxu0
  %v1151 = vpop.f32.mrb[0].mxu0
  %v1152 = vpop.f32.mrb[0].mxu0
  %1153 = vdwg.mxu0
  %1154 = vmatprep.subr.bf16.mxu0 0
  %1155 = vmatpush1.bf16.msra.mxu0 %v954
  %1156 = vmatprep.subr.bf16.mxu0 0
  %1157 = vmatpush1.bf16.msra.mxu0 %v955
  %1158 = vmatprep.subr.bf16.mxu0 0
  %1159 = vmatpush1.bf16.msra.mxu0 %v956
  %1160 = vmatprep.subr.bf16.mxu0 0
  %1161 = vmatpush1.bf16.msra.mxu0 %v957
  %1162 = vmatprep.subr.bf16.mxu0 0
  %1163 = vmatpush1.bf16.msra.mxu0 %v958
  %1164 = vmatprep.subr.bf16.mxu0 0
  %1165 = vmatpush1.bf16.msra.mxu0 %v959
  %1166 = vmatprep.subr.bf16.mxu0 0
  %1167 = vmatpush1.bf16.msra.mxu0 %v960
  %1168 = vmatprep.subr.bf16.mxu0 0
  %1169 = vmatpush1.bf16.msra.mxu0 %v961
  %1170 = vmatprep.subr.bf16.mxu0 0
  %1171 = vmatpush1.bf16.msra.mxu0 %v962
  %1172 = vmatprep.subr.bf16.mxu0 0
  %1173 = vmatpush1.bf16.msra.mxu0 %v963
  %1174 = vmatprep.subr.bf16.mxu0 0
  %1175 = vmatpush1.bf16.msra.mxu0 %v964
  %1176 = vmatprep.subr.bf16.mxu0 0
  %1177 = vmatpush1.bf16.msra.mxu0 %v965
  %1178 = vmatprep.subr.bf16.mxu0 0
  %1179 = vmatpush1.bf16.msra.mxu0 %v966
  %1180 = vmatprep.subr.bf16.mxu0 0
  %1181 = vmatpush1.bf16.msra.mxu0 %v967
  %1182 = vmatprep.subr.bf16.mxu0 0
  %1183 = vmatpush1.bf16.msra.mxu0 %v968
  %1184 = vmatprep.subr.bf16.mxu0 0
  %1185 = vmatpush1.bf16.msra.mxu0 %v969
  %1186 = vmatprep.mubr.bf16.mxu0 %v641
  %1187 = vmatmul.mubr.bf16.gmra.mrb[0].mxu0 %v639
  %v1188 = vpop.f32.mrb[0].mxu0
  %v1189 = vadd.f32 %v1149, %v1188
  %v1190 = vpop.f32.mrb[0].mxu0
  %v1191 = vpop.f32.mrb[0].mxu0
  %v1192 = vpop.f32.mrb[0].mxu0
  %1193 = vdwg.mxu0
  %v1194 = vmax.f32 %v1189, 0.0
  %v1195 = vld [vmem:[%s6] sm:$0xf]
  %v1196 = vmul.f32 %v1194, %v1195
  %vm1197 = vcmask 519168
  %v1198 = vsel %vm1197, %v1196, 0.0
  %1199 = vadd.xlane.f32.xlu0 %v1198
  %v1200 = vpop.xlane.xlu0 %1199
  %s1201 = sld [smem:[#allocation3]]
  %v1202 = vstv %s1201
  %v1203 = vadd.f32 %v1200, %v1202
  %v1205 = vlaneseq
  %v1206 = vand.u32 %v1205, 127
  %v1207 = vlaneseq
  %v1208 = vshrl.u32 %v1207, 7
  %v1209 = vsub.s32 %v1206, %v1208
  %v1210 = vrot.slane %v1203, %v1209
  %vm1212 = vcmask 24576
  %1213 = vst.msk [vmem:[%s8] sm:$0x1] %vm1212, %v1210
  // Predicated region
  $region34: #{_lambda_.1} parent=0 // pred_check
    _
  $region35: #{_lambda_.1} parent=0 // pred_check_branch
    %1215 = sbr.rel (0) target = $region37
  $region36: #{_lambda_.1} parent=0 // pred_region
    _
  $region37: #{_lambda_.1} parent=0 // pred_fallthru
    _
  // Predicated region
  $region38: #{_lambda_.1} parent=0 // pred_check
    _
  $region39: #{_lambda_.1} parent=0 // pred_check_branch
    %1217 = sbr.rel (0) target = $region41
  $region40: #{_lambda_.1} parent=0 // pred_region
    _
  $region41: #{_lambda_.1} parent=0 // pred_fallthru
    _

</llo_original>
